<compile_context>
chip_gen: v7x
topology: tpu7x:2x2x1
jax: 0.10.0
libtpu: 0.0.40
codegen_flags: <defaults>
</compile_context>

<pallas_src>
import functools

import jax
import jax.numpy as jnp
from jax.experimental import pallas as pl
from jax.experimental.pallas import tpu as pltpu


def _round_up(x, m):
    return ((x + m - 1) // m) * m


@functools.lru_cache(maxsize=1)
def _tpu_hw_info():
    """(num_tensorcores, vmem_bytes, is_v5e) with conservative fallbacks."""
    num_cores, vmem_bytes, is_v5e = 1, 64 << 20, False
    try:
        info = pltpu.get_tpu_info()
        vmem_bytes = int(getattr(info, "vmem_capacity_bytes", vmem_bytes))
        num_cores = int(getattr(info, "num_cores", num_cores) or num_cores)
    except Exception:
        pass
    try:
        kind = jax.devices()[0].device_kind.lower()
        is_v5e = ("v5 lite" in kind) or ("v5e" in kind) or ("v5litepod" in kind)
    except Exception:
        pass
    return num_cores, vmem_bytes, is_v5e


def _lane_round(n, is_v5e):
    # v6e/v7x MXU is 256x256 -> pad larger dims to multiples of 256 there;
    # v5e MXU is 128x128 (and tiny dims stay at 128 to avoid wasted zero-work).
    mult = 128 if (is_v5e or n <= 128) else 256
    return _round_up(n, mult)


@functools.lru_cache(maxsize=1)
def _single_buffer_supported():
    """One-time probe: can grid-invariant operands use pipeline_mode=pl.Buffered(1)?"""
    try:
        spec = pl.BlockSpec((8, 128), lambda i: (0, 0), pipeline_mode=pl.Buffered(1))
    except Exception:
        return False
    try:
        def _copy(a_ref, o_ref):
            o_ref[...] = a_ref[...]
        f = pl.pallas_call(
            _copy,
            out_shape=jax.ShapeDtypeStruct((16, 128), jnp.float32),
            grid=(2,),
            in_specs=[spec],
            out_specs=pl.BlockSpec((8, 128), lambda i: (i, 0)),
        )
        jax.block_until_ready(f(jnp.zeros((8, 128), jnp.float32)))
        return True
    except Exception:
        return False


def _const_spec(shape):
    """BlockSpec for a grid-invariant operand; single-buffered when supported."""
    index_map = lambda i: (0,) * len(shape)
    if _single_buffer_supported():
        return pl.BlockSpec(shape, index_map, pipeline_mode=pl.Buffered(1))
    return pl.BlockSpec(shape, index_map)


def subnet_kernel(x_ref, w1_ref, w2_ref, w3_ref, b_ref, out_ref):
    # x arrives in f32 (no host-side cast pass); cast to bf16 here for the MXU.
    x = x_ref[...].astype(jnp.bfloat16)                       # (TB, IN_P)
    b = b_ref[...]                                            # (8, HID_P) f32; rows 0..2 = b1,b2,b3
    y = jnp.dot(x, w1_ref[...], preferred_element_type=jnp.float32) + b[0:1, :]
    y = jnp.maximum(y, 0.0).astype(jnp.bfloat16)
    y = jnp.dot(y, w2_ref[...], preferred_element_type=jnp.float32) + b[1:2, :]
    y = jnp.maximum(y, 0.0).astype(jnp.bfloat16)
    y = jnp.dot(y, w3_ref[...], preferred_element_type=jnp.float32) + b[2:3, :]
    out_ref[...] = jnp.maximum(y, 0.0).astype(out_ref.dtype)


def prepare_subnet_params(params, *, eps=1e-5):
    """Fold BatchNorm1d (eval mode) into linear_1, pad to lane width, cast to bf16,
    and pack the biases. Run once per parameter set (hoisted out of the call path)."""
    _, _, is_v5e = _tpu_hw_info()
    in_size, hidden = params["w1"].shape

    scale = params["gamma"] * jax.lax.rsqrt(params["running_var"] + eps)   # (in,)
    shift = params["beta"] - params["running_mean"] * scale                # (in,)
    w1_f = params["w1"] * scale[:, None]                                   # (in, hidden)
    b1_f = params["b1"] + shift @ params["w1"]                             # (hidden,)

    in_p = _lane_round(in_size, is_v5e)
    hid_p = _lane_round(hidden, is_v5e)

    def pad2(w, r, c):
        return jnp.pad(w, ((0, r - w.shape[0]), (0, c - w.shape[1])))

    w1 = pad2(w1_f, in_p, hid_p).astype(jnp.bfloat16)
    w2 = pad2(params["w2"], hid_p, hid_p).astype(jnp.bfloat16)
    w3 = pad2(params["w3"], hid_p, hid_p).astype(jnp.bfloat16)

    # Pack b1/b2/b3 into one (8, hid_p) f32 slab -> a single 8-sublane-aligned DMA.
    b_packed = jnp.zeros((8, hid_p), jnp.float32)
    b_packed = b_packed.at[0, :hidden].set(b1_f)
    b_packed = b_packed.at[1, :hidden].set(params["b2"])
    b_packed = b_packed.at[2, :hidden].set(params["b3"])

    return {
        "w1": w1, "w2": w2, "w3": w3, "b": b_packed,
        "in_size": int(in_size), "hidden": int(hidden),
        "in_p": int(in_p), "hid_p": int(hid_p),
    }


def subnet_forward_prepared(x, prep, *, out_dtype=jnp.float32):
    B = x.shape[0]
    in_size, hidden = prep["in_size"], prep["hidden"]
    in_p, hid_p = prep["in_p"], prep["hid_p"]
    num_cores, vmem_bytes, is_v5e = _tpu_hw_info()

    # --- Batch tile sized against a generation-aware VMEM budget ---
    big_vmem = vmem_bytes >= (96 << 20)                      # 128 MiB parts (v5e / v6e)
    max_block_b = 256 if is_v5e else (1024 if big_vmem else 512)
    act_budget = (24 << 20) if big_vmem else (12 << 20)
    out_bytes = jnp.dtype(out_dtype).itemsize
    # double-buffered f32 x tile + double-buffered out tile + in-kernel y1/y2 (f32 + bf16).
    act_bytes_per_row = 2 * in_p * 4 + 2 * hid_p * out_bytes + 12 * hid_p
    block_b = max(8, min(max_block_b, (act_budget // act_bytes_per_row) // 8 * 8))
    B8 = _round_up(B, 8)
    block_b = min(block_b, B8)
    # Multi-TensorCore parts only: aim for >= 2 grid steps per core so each core can
    # overlap its x-tile DMA with compute. Single-TC v5e/v6e keep one big tile.
    if num_cores >= 2:
        target_steps = 2 * num_cores
        if B8 // block_b < target_steps and B8 >= 8 * target_steps:
            block_b = _round_up(pl.cdiv(B8, target_steps), 8)
    B_pad = _round_up(B, block_b)

    # Pad only (stays f32; the bf16 cast happens inside the kernel).
    x_p = jnp.pad(x, ((0, B_pad - B), (0, in_p - in_size)))

    # Single-buffered weights + bias slab + pipelined activation tiles (+25% margin),
    # clamped to 3/4 of the physical per-core VMEM for this generation.
    w_buffers = 1 if _single_buffer_supported() else 2
    weight_bytes = w_buffers * ((prep["w1"].size + prep["w2"].size + prep["w3"].size) * 2
                                + prep["b"].size * 4)
    need = weight_bytes + block_b * act_bytes_per_row
    vmem_limit = int(min(max(need + need // 4 + (2 << 20), 16 << 20), vmem_bytes * 3 // 4))

    grid_spec = pltpu.PrefetchScalarGridSpec(
        num_scalar_prefetch=0,
        grid=(B_pad // block_b,),
        in_specs=[
            pl.BlockSpec((block_b, in_p), lambda i: (i, 0)),   # x (tiled over batch)
            _const_spec((in_p, hid_p)),                        # W1 (BN folded in)
            _const_spec((hid_p, hid_p)),                       # W2
            _const_spec((hid_p, hid_p)),                       # W3
            _const_spec((8, hid_p)),                           # packed b1/b2/b3
        ],
        out_specs=pl.BlockSpec((block_b, hid_p), lambda i: (i, 0)),
    )

    out = pl.pallas_call(
        subnet_kernel,
        out_shape=jax.ShapeDtypeStruct((B_pad, hid_p), out_dtype),
        grid_spec=grid_spec,
        compiler_params=pltpu.CompilerParams(
            dimension_semantics=("parallel",),
            vmem_limit_bytes=vmem_limit),
    )(x_p, prep["w1"], prep["w2"], prep["w3"], prep["b"])

    return out[:B, :hidden]


def make_subnet_forward(params, *, eps=1e-5, out_dtype=jnp.float32):
    """Build a jitted forward with all weight prep hoisted out of the per-call path."""
    _single_buffer_supported()                     # warm the capability probe once
    prep = prepare_subnet_params(params, eps=eps)
    return jax.jit(functools.partial(subnet_forward_prepared, prep=prep, out_dtype=out_dtype))


def subnet_reference(x, params, eps=1e-5):
    normed = (x - params["running_mean"]) * jax.lax.rsqrt(params["running_var"] + eps)
    normed = normed * params["gamma"] + params["beta"]
    y = jnp.maximum(normed @ params["w1"] + params["b1"], 0.0)
    y = jnp.maximum(y @ params["w2"] + params["b2"], 0.0)
    y = jnp.maximum(y @ params["w3"] + params["b3"], 0.0)
    return y


def init_params(key, in_size, hidden):
    ks = jax.random.split(key, 8)
    xavier = lambda k, fan_in, fan_out: (
        jax.random.normal(k, (fan_in, fan_out), jnp.float32)
        * jnp.sqrt(2.0 / (fan_in + fan_out)))
    return {
        # BatchNorm1d state (synthetic values so the BN is non-trivial)
        "gamma": 1.0 + 0.1 * jax.random.normal(ks[0], (in_size,), jnp.float32),
        "beta": 0.1 * jax.random.normal(ks[1], (in_size,), jnp.float32),
        "running_mean": 0.2 * jax.random.normal(ks[2], (in_size,), jnp.float32),
        "running_var": 1.0 + 0.1 * jax.random.uniform(ks[3], (in_size,), jnp.float32),
        # Linear layers stored pre-transposed as (in, out) so the kernel does x @ W
        "w1": xavier(ks[4], in_size, hidden),
        "b1": jnp.zeros((hidden,), jnp.float32),
        "w2": xavier(ks[5], hidden, hidden),
        "b2": jnp.zeros((hidden,), jnp.float32),
        "w3": xavier(ks[6], hidden, hidden),
        "b3": jnp.zeros((hidden,), jnp.float32),
    }


if __name__ == "__main__":
    B, IN_SIZE, HIDDEN = 8, 16, 32

    key = jax.random.PRNGKey(0)
    k_x, k_p = jax.random.split(key)
    x = jax.random.normal(k_x, (B, IN_SIZE), jnp.float32)
    params = init_params(k_p, IN_SIZE, HIDDEN)

    fwd = make_subnet_forward(params)         # weight prep hoisted here (runs once)
    out = jax.block_until_ready(fwd(x))

    ref = subnet_reference(x, params)
    assert out.shape == (B, HIDDEN)
    # bf16 MXU operands (f32 accumulation) -> loose tolerance vs. the f32 reference.
    assert jnp.allclose(out, ref, atol=5e-2, rtol=5e-2), "mismatch vs JAX reference"

    print("KERNEL_OK")
</pallas_src>

<mosaic_0001>
module attributes {stable_mosaic.version = 11 : i64} {
  func.func @_copy(%arg0: i32, %arg1: memref<8x128xf32, #tpu.memory_space<vmem>>, %arg2: memref<8x128xf32, #tpu.memory_space<vmem>>) attributes {dimension_semantics = [#tpu.dimension_semantics<arbitrary>], iteration_bounds = array<i64: 2>, scalar_prefetch = 0 : i64, scratch_operands = 0 : i64, tpu.core_type = #tpu.core_type<tc>, window_params = [{pipeline_mode = #tpu.pipeline_mode<synchronous>, transform_indices = @transform_0, window_bounds = array<i64: 8, 128>}, {transform_indices = @transform_1, window_bounds = array<i64: 8, 128>}]} {
    %c0 = arith.constant 0 : index
    %c0_0 = arith.constant 0 : index
    %0 = vector.load %arg1[%c0, %c0_0] : memref<8x128xf32, #tpu.memory_space<vmem>>, vector<8x128xf32>
    %c0_1 = arith.constant 0 : index
    %c0_2 = arith.constant 0 : index
    %1 = vector.load %arg2[%c0_1, %c0_2] : memref<8x128xf32, #tpu.memory_space<vmem>>, vector<8x128xf32>
    tpu.vector_store %arg2[%c0_1, %c0_2], %0 {strides = array<i32>} : memref<8x128xf32, #tpu.memory_space<vmem>>, vector<8x128xf32>,
    return
  }
  func.func @transform_0(%arg0: i32) -> (i32, i32) {
    %c0_i32 = arith.constant 0 : i32
    %c0_i32_0 = arith.constant 0 : i32
    %c0_i32_1 = arith.constant 0 : i32
    return %c0_i32, %c0_i32_0 : i32, i32
  }
  func.func @transform_1(%arg0: i32) -> (i32, i32) {
    %c0_i32 = arith.constant 0 : i32
    %c0_i32_0 = arith.constant 0 : i32
    return %arg0, %c0_i32 : i32, i32
  }
}

module attributes {stable_mosaic.version = 11 : i64} {
  func.func @subnet_kernel(%arg0: i32, %arg1: memref<8x128xf32, #tpu.memory_space<vmem>>, %arg2: memref<128x128xbf16, #tpu.memory_space<vmem>>, %arg3: memref<128x128xbf16, #tpu.memory_space<vmem>>, %arg4: memref<128x128xbf16, #tpu.memory_space<vmem>>, %arg5: memref<8x128xf32, #tpu.memory_space<vmem>>, %arg6: memref<8x128xf32, #tpu.memory_space<vmem>>) attributes {dimension_semantics = [#tpu.dimension_semantics<parallel>], iteration_bounds = array<i64: 1>, scalar_prefetch = 0 : i64, scratch_operands = 0 : i64, tpu.core_type = #tpu.core_type<tc>, window_params = [{transform_indices = @transform_0, window_bounds = array<i64: 8, 128>}, {pipeline_mode = #tpu.pipeline_mode<synchronous>, transform_indices = @transform_1, window_bounds = array<i64: 128, 128>}, {pipeline_mode = #tpu.pipeline_mode<synchronous>, transform_indices = @transform_2, window_bounds = array<i64: 128, 128>}, {pipeline_mode = #tpu.pipeline_mode<synchronous>, transform_indices = @transform_3, window_bounds = array<i64: 128, 128>}, {pipeline_mode = #tpu.pipeline_mode<synchronous>, transform_indices = @transform_4, window_bounds = array<i64: 8, 128>}, {transform_indices = @transform_5, window_bounds = array<i64: 8, 128>}]} {
    %c0 = arith.constant 0 : index
    %c0_0 = arith.constant 0 : index
    %0 = vector.load %arg1[%c0, %c0_0] : memref<8x128xf32, #tpu.memory_space<vmem>>, vector<8x128xf32>
    %1 = arith.truncf %0 : vector<8x128xf32> to vector<8x128xbf16>
    %c0_1 = arith.constant 0 : index
    %c0_2 = arith.constant 0 : index
    %2 = vector.load %arg5[%c0_1, %c0_2] : memref<8x128xf32, #tpu.memory_space<vmem>>, vector<8x128xf32>
    %c0_3 = arith.constant 0 : index
    %c0_4 = arith.constant 0 : index
    %3 = vector.load %arg2[%c0_3, %c0_4] : memref<128x128xbf16, #tpu.memory_space<vmem>>, vector<128x128xbf16>
    %cst = arith.constant dense<0.000000e+00> : vector<8x128xf32>
    %4 = tpu.matmul %1, %3, %cst {dimension_numbers = #tpu.dot_dimension_numbers<[1], [0], [0], [1], [0, 0, 1, 1], [], []>} : vector<8x128xbf16>, vector<128x128xbf16>, vector<8x128xf32> -> vector<8x128xf32>
    %5 = vector.extract_strided_slice %2 {offsets = [0, 0], sizes = [1, 128], strides = [1, 1]} : vector<8x128xf32> to vector<1x128xf32>
    %6 = vector.broadcast %5 : vector<1x128xf32> to vector<8x128xf32>
    %7 = arith.addf %4, %6 : vector<8x128xf32>
    %cst_5 = arith.constant 0.000000e+00 : f32
    %8 = vector.broadcast %cst_5 : f32 to vector<8x128xf32>
    %9 = arith.maximumf %7, %8 : vector<8x128xf32>
    %10 = arith.truncf %9 : vector<8x128xf32> to vector<8x128xbf16>
    %c0_6 = arith.constant 0 : index
    %c0_7 = arith.constant 0 : index
    %11 = vector.load %arg3[%c0_6, %c0_7] : memref<128x128xbf16, #tpu.memory_space<vmem>>, vector<128x128xbf16>
    %cst_8 = arith.constant dense<0.000000e+00> : vector<8x128xf32>
    %12 = tpu.matmul %10, %11, %cst_8 {dimension_numbers = #tpu.dot_dimension_numbers<[1], [0], [0], [1], [0, 0, 1, 1], [], []>} : vector<8x128xbf16>, vector<128x128xbf16>, vector<8x128xf32> -> vector<8x128xf32>
    %13 = vector.extract_strided_slice %2 {offsets = [1, 0], sizes = [1, 128], strides = [1, 1]} : vector<8x128xf32> to vector<1x128xf32>
    %14 = vector.broadcast %13 : vector<1x128xf32> to vector<8x128xf32>
    %15 = arith.addf %12, %14 : vector<8x128xf32>
    %cst_9 = arith.constant 0.000000e+00 : f32
    %16 = vector.broadcast %cst_9 : f32 to vector<8x128xf32>
    %17 = arith.maximumf %15, %16 : vector<8x128xf32>
    %18 = arith.truncf %17 : vector<8x128xf32> to vector<8x128xbf16>
    %c0_10 = arith.constant 0 : index
    %c0_11 = arith.constant 0 : index
    %19 = vector.load %arg4[%c0_10, %c0_11] : memref<128x128xbf16, #tpu.memory_space<vmem>>, vector<128x128xbf16>
    %cst_12 = arith.constant dense<0.000000e+00> : vector<8x128xf32>
    %20 = tpu.matmul %18, %19, %cst_12 {dimension_numbers = #tpu.dot_dimension_numbers<[1], [0], [0], [1], [0, 0, 1, 1], [], []>} : vector<8x128xbf16>, vector<128x128xbf16>, vector<8x128xf32> -> vector<8x128xf32>
    %21 = vector.extract_strided_slice %2 {offsets = [2, 0], sizes = [1, 128], strides = [1, 1]} : vector<8x128xf32> to vector<1x128xf32>
    %22 = vector.broadcast %21 : vector<1x128xf32> to vector<8x128xf32>
    %23 = arith.addf %20, %22 : vector<8x128xf32>
    %cst_13 = arith.constant 0.000000e+00 : f32
    %24 = vector.broadcast %cst_13 : f32 to vector<8x128xf32>
    %25 = arith.maximumf %23, %24 : vector<8x128xf32>
    %c0_14 = arith.constant 0 : index
    %c0_15 = arith.constant 0 : index
    %26 = vector.load %arg6[%c0_14, %c0_15] : memref<8x128xf32, #tpu.memory_space<vmem>>, vector<8x128xf32>
    tpu.vector_store %arg6[%c0_14, %c0_15], %25 {strides = array<i32>} : memref<8x128xf32, #tpu.memory_space<vmem>>, vector<8x128xf32>,
    return
  }
  func.func @transform_0(%arg0: i32) -> (i32, i32) {
    %c0_i32 = arith.constant 0 : i32
    %c0_i32_0 = arith.constant 0 : i32
    return %arg0, %c0_i32 : i32, i32
  }
  func.func @transform_1(%arg0: i32) -> (i32, i32) {
    %c0_i32 = arith.constant 0 : i32
    %c0_i32_0 = arith.constant 0 : i32
    %c0_i32_1 = arith.constant 0 : i32
    return %c0_i32, %c0_i32_0 : i32, i32
  }
  func.func @transform_2(%arg0: i32) -> (i32, i32) {
    %c0_i32 = arith.constant 0 : i32
    %c0_i32_0 = arith.constant 0 : i32
    %c0_i32_1 = arith.constant 0 : i32
    return %c0_i32, %c0_i32_0 : i32, i32
  }
  func.func @transform_3(%arg0: i32) -> (i32, i32) {
    %c0_i32 = arith.constant 0 : i32
    %c0_i32_0 = arith.constant 0 : i32
    %c0_i32_1 = arith.constant 0 : i32
    return %c0_i32, %c0_i32_0 : i32, i32
  }
  func.func @transform_4(%arg0: i32) -> (i32, i32) {
    %c0_i32 = arith.constant 0 : i32
    %c0_i32_0 = arith.constant 0 : i32
    %c0_i32_1 = arith.constant 0 : i32
    return %c0_i32, %c0_i32_0 : i32, i32
  }
  func.func @transform_5(%arg0: i32) -> (i32, i32) {
    %c0_i32 = arith.constant 0 : i32
    %c0_i32_0 = arith.constant 0 : i32
    return %arg0, %c0_i32 : i32, i32
  }
}

</mosaic_0001>

<llo_original>
// kernel: tpu_custom_call.1
$region0: #{tpu_custom_call.1}
  #allocation0 [shape = 'u32[]', space=smem, size = 0x4, offset = 0x4, fixed_abs, tag = 'smem constant byte address 0x4 - core index']
  #allocation1 [shape = 'u32[144,128]{1,0:T(1,128)}', space=vmem, size = 0x12000, scoped, tag = 'internal scratch']
  %s0 = inlined_call_operand.hbm [shape: f32[8,128], index: 0, kind: input, shape index: {}]
  %s1 = inlined_call_operand.hbm [shape: f32[16,128], index: 1, kind: output, shape index: {}]
  %s2 = sld [smem:[#allocation0]]
  $region41: #{tpu_custom_call.1} parent=0
    _
  %s4 = ssub.s32 1, %s2
  %s5 = scalar_select 0, %s4, %s2
  $region1: #{tpu_custom_call.1} parent=0
    #allocation2 [shape = 'u8[4096]{0}', space=vmem, size = 0x1000, scoped, tag = 'input window, operand 0, single buffered']
    #allocation3 [shape = 's32[2]{0}', space=sflag, size = 0x8, scoped, tag = 'scoped memory for tpu_custom_call.1']
    #allocation4 [shape = 's32[2]{0}', space=sflag, size = 0x8, scoped, tag = 'scoped memory for tpu_custom_call.1']
    #allocation5 [shape = 'u8[8192]{0}', space=vmem, size = 0x2000, scoped, tag = 'output window, operand 0']
    %6 = vsyncpa [#allocation3], 0
    %7 = vsyncpa [#allocation4], 0
    %s8 = scalar_lea.sflag [#allocation4], 1
    %9 = vsyncpa %s8, 0
    loop: start=0, step=1, limit=4
    $region2: #{tpu_custom_call.1} parent=1 // loop_pre_header
      _
    $region3: #{tpu_custom_call.1} parent=1 // loop_header
      %s11 = sphi 0, %s15
      %p12 = scmp.ge.s32.totalorder %s11, 4
      %s19 = sphi 0, %s19
      %s21 = sphi 0, %s19
      %s22 = sphi 0, %s21
      %s36 = sphi 0, %s22
      %s42 = sphi 0, %s44
      %s45 = sphi 0, %s42
      %s46 = sphi 0, %s45
      %s62 = sphi 0, %s46
    $region4: #{tpu_custom_call.1} parent=1 // loop_header_branch
      %14 = sbr.rel (%p12) target = $region8
    $region5: #{tpu_custom_call.1} parent=1 // loop_body
      %s16 = ssub.s32 %s11, 1
      %s17 = ssub.s32 %s11, 2
      %s18 = sadd.s32 %s11, 1
      %s20 = sadd.s32 %s19, 1
      %p23 = scmp.eq.s32.totalorder %s11, 1
      %p24 = scmp.ne.s32.totalorder %s19, %s21
      %p25 = scmp.eq.s32.totalorder %s11, 0
      %p26 = por %p24, %p25
      %p27 = scmp.ne.s32.totalorder %s19, %s21
      %p28 = scmp.eq.s32.totalorder %s16, 1
      %p29 = por %p27, %p28
      %p30 = scmp.ne.s32.totalorder %s21, %s22
      %p31 = scmp.eq.s32.totalorder %s16, 0
      %p32 = por %p30, %p31
      %p33 = scmp.ne.s32.totalorder %s21, %s22
      %p34 = scmp.eq.s32.totalorder %s17, 1
      %p35 = por %p33, %p34
      %p37 = scmp.ne.s32.totalorder %s22, %s36
      %p38 = scmp.eq.s32.totalorder %s17, 0
      %p39 = por %p37, %p38
      %s40 = ssub.s32 %s11, %s18
      %p41 = scmp.eq.s32.totalorder %s40, 0
      %s43 = sadd.s32 %s42, 1
      %s44 = scalar_select %p41, %s42, %s43
      %p47 = pneg %p41
      %p48 = scmp.eq.s32.totalorder %s11, 1
      %p49 = por %p47, %p48
      %p50 = scmp.ne.s32.totalorder %s42, %s45
      %p51 = scmp.eq.s32.totalorder %s11, 0
      %p52 = por %p50, %p51
      %p53 = scmp.ne.s32.totalorder %s42, %s45
      %p54 = scmp.eq.s32.totalorder %s16, 1
      %p55 = por %p53, %p54
      %p56 = scmp.ne.s32.totalorder %s45, %s46
      %p57 = scmp.eq.s32.totalorder %s16, 0
      %p58 = por %p56, %p57
      %p59 = scmp.ne.s32.totalorder %s45, %s46
      %p60 = scmp.eq.s32.totalorder %s17, 1
      %p61 = por %p59, %p60
      %p63 = scmp.ne.s32.totalorder %s46, %s62
      %p64 = scmp.eq.s32.totalorder %s17, 0
      %p65 = por %p63, %p64
      %p66 = scmp.le.s32.totalorder 1, %s11
      %p67 = scmp.lt.s32.totalorder %s11, 3
      %p68 = pnand %p66, %p67
      %p69 = pneg %p68
      // Predicated region
      $region9: #{tpu_custom_call.1} parent=5 // pred_check
        _
      $region10: #{tpu_custom_call.1} parent=5 // pred_check_branch
        %71 = sbr.rel (%p68) target = $region12
      $region11: #{tpu_custom_call.1} parent=5 // pred_region
        %s72 = ssub.s32 %s11, 1
        // Predicated region
        $region13: #{tpu_custom_call.1} parent=11 // pred_check
          %p73 = pneg %p32
        $region14: #{tpu_custom_call.1} parent=11 // pred_check_branch
          %75 = sbr.rel (%p73) target = $region16
        $region15: #{tpu_custom_call.1} parent=11 // pred_region
          %s77 = ssub.s32 128, 128
          %78 = vsyncadd [#allocation3], %s77
          %s80 = sshll.u32 [#allocation2], 4
          %s81 = int_to_ptr.vmem [resolvable:$true] %s80
          %83 = dma.hbm_to_vmem [thread:$0]  %s0, 128, %s81, [#allocation3]
        $region16: #{tpu_custom_call.1} parent=11 // pred_fallthru
          _
      $region12: #{tpu_custom_call.1} parent=5 // pred_fallthru
        _
      %p84 = scmp.lt.s32.totalorder %s11, 2
      // Predicated region
      $region17: #{tpu_custom_call.1} parent=5 // pred_check
        %p85 = pneg %p84
      $region18: #{tpu_custom_call.1} parent=5 // pred_check_branch
        %87 = sbr.rel (%p85) target = $region20
      $region19: #{tpu_custom_call.1} parent=5 // pred_region
        _
      $region20: #{tpu_custom_call.1} parent=5 // pred_fallthru
        _
      %p88 = scmp.le.s32.totalorder 1, %s11
      %p89 = scmp.lt.s32.totalorder %s11, 3
      %p90 = pnand %p88, %p89
      %p91 = pneg %p90
      // Predicated region
      $region21: #{tpu_custom_call.1} parent=5 // pred_check
        _
      $region22: #{tpu_custom_call.1} parent=5 // pred_check_branch
        %93 = sbr.rel (%p90) target = $region24
      $region23: #{tpu_custom_call.1} parent=5 // pred_region
        %s94 = ssub.s32 %s11, 1
        // Predicated region
        $region25: #{tpu_custom_call.1} parent=23 // pred_check
          %p95 = pneg %p32
        $region26: #{tpu_custom_call.1} parent=23 // pred_check_branch
          %97 = sbr.rel (%p95) target = $region28
        $region27: #{tpu_custom_call.1} parent=23 // pred_region
          %98 = dma.done [#allocation3], 128
        $region28: #{tpu_custom_call.1} parent=23 // pred_fallthru
          _
        %p99 = pneg %p32
        %p100 = pneg %p29
        %p101 = pneg %p58
        %p102 = pneg %p55
        %s103 = sand.u32 %s45, 1
        %s104 = scalar_lea.sflag [#allocation4], %s103
        %s105 = sand.u32 %s45, 1
        %s106 = smul.addr %s105, 8
        %s107 = scalar_lea.vmem [#allocation5], %s106
        %v108 = vld [vmem:[#allocation2] sm:$0xff]
        %109 = vst [vmem:[%s107] sm:$0xff] %v108
        %s110 = sand.u32 %s45, 1
        %s111 = scalar_lea.sflag [#allocation4], %s110
        %s112 = sand.u32 %s45, 1
        %s113 = smul.addr %s112, 8
        %s114 = scalar_lea.vmem [#allocation5], %s113
        // Predicated region
        $region29: #{tpu_custom_call.1} parent=23 // pred_check
          %p115 = pneg %p55
        $region30: #{tpu_custom_call.1} parent=23 // pred_check_branch
          %117 = sbr.rel (%p115) target = $region32
        $region31: #{tpu_custom_call.1} parent=23 // pred_region
          %s119 = ssub.s32 128, 128
          %120 = vsyncadd %s111, %s119
          %s121 = smul.addr %s16, 128
          %s122 = scalar_lea.hbm %s1, %s121
          %s124 = sshll.u32 %s114, 4
          %s125 = int_to_ptr.vmem [resolvable:$true] %s124
          %127 = dma.vmem_to_hbm [thread:$0]  %s125, 128, %s122, %s111
        $region32: #{tpu_custom_call.1} parent=23 // pred_fallthru
          _
      $region24: #{tpu_custom_call.1} parent=5 // pred_fallthru
        _
      %p128 = scmp.le.s32.totalorder 2, %s11
      // Predicated region
      $region33: #{tpu_custom_call.1} parent=5 // pred_check
        %p129 = pneg %p128
      $region34: #{tpu_custom_call.1} parent=5 // pred_check_branch
        %131 = sbr.rel (%p129) target = $region36
      $region35: #{tpu_custom_call.1} parent=5 // pred_region
        %s132 = ssub.s32 %s11, 2
        // Predicated region
        $region37: #{tpu_custom_call.1} parent=35 // pred_check
          %p133 = pneg %p61
        $region38: #{tpu_custom_call.1} parent=35 // pred_check_branch
          %135 = sbr.rel (%p133) target = $region40
        $region39: #{tpu_custom_call.1} parent=35 // pred_region
          %s136 = sand.u32 %s46, 1
          %s137 = scalar_lea.sflag [#allocation4], %s136
          %s138 = sand.u32 %s46, 1
          %s139 = smul.addr %s138, 8
          %s140 = scalar_lea.vmem [#allocation5], %s139
          %141 = dma.done %s137, 128
        $region40: #{tpu_custom_call.1} parent=35 // pred_fallthru
          _
      $region36: #{tpu_custom_call.1} parent=5 // pred_fallthru
        _
    $region6: #{tpu_custom_call.1} parent=1 // loop_footer
      %s15 = sadd.s32 1, %s11
    $region7: #{tpu_custom_call.1} parent=1 // loop_footer_branch
      %10 = sbr.rel target = $region3
    $region8: #{tpu_custom_call.1} parent=1 // loop_exit
      _
    %142 = vsyncpa [#allocation3], 1
    %s143 = scalar_lea.sflag [#allocation3], 1
    %144 = vsyncpa %s143, 1
    %145 = vsyncpa [#allocation4], 1
    %s146 = scalar_lea.sflag [#allocation4], 1
    %147 = vsyncpa %s146, 1

// kernel: subnet_forward_prepared.1
$region0: #{subnet_forward_prepared.1}
  #allocation0 [shape = 'u32[]', space=smem, size = 0x4, offset = 0x4, fixed_abs, tag = 'smem constant byte address 0x4 - core index']
  #allocation1 [shape = 'u32[144,128]{1,0:T(1,128)}', space=vmem, size = 0x12000, scoped, tag = 'internal scratch']
  %s0 = inlined_call_operand.vmem [shape: f32[8,128], index: 0, kind: input, shape index: {}]
  %s1 = inlined_call_operand.hbm [shape: bf16[128,128], index: 1, kind: input, shape index: {}]
  %s2 = inlined_call_operand.hbm [shape: bf16[128,128], index: 2, kind: input, shape index: {}]
  %s3 = inlined_call_operand.hbm [shape: bf16[128,128], index: 3, kind: input, shape index: {}]
  %s4 = inlined_call_operand.vmem [shape: f32[8,128], index: 4, kind: input, shape index: {}]
  %s5 = inlined_call_operand.hbm [shape: f32[8,128], index: 5, kind: output, shape index: {}]
  %s6 = sld [smem:[#allocation0]]
  $region42: #{subnet_forward_prepared.1} parent=0
    _
  %s8 = ssub.s32 1, %s6
  %s9 = scalar_select 0, %s8, %s6
  $region1: #{subnet_forward_prepared.1} parent=0
    #allocation2 [shape = 'u8[32768]{0}', space=vmem, size = 0x8000, scoped, tag = 'input window, operand 1, single buffered']
    #allocation3 [shape = 's32[1]{0}', space=sflag, size = 0x4, scoped, tag = 'scoped memory for subnet_forward_prepared.1']
    #allocation4 [shape = 's32[1]{0}', space=sflag, size = 0x4, scoped, tag = 'scoped memory for subnet_forward_prepared.1']
    #allocation5 [shape = 'u8[32768]{0}', space=vmem, size = 0x8000, scoped, tag = 'input window, operand 2, single buffered']
    #allocation6 [shape = 's32[1]{0}', space=sflag, size = 0x4, scoped, tag = 'scoped memory for subnet_forward_prepared.1']
    #allocation7 [shape = 'u8[32768]{0}', space=vmem, size = 0x8000, scoped, tag = 'input window, operand 3, single buffered']
    #allocation8 [shape = 'u8[4096]{0}', space=vmem, size = 0x1000, scoped, tag = 'output window, operand 0, single buffered']
    %10 = vsyncpa [#allocation3], 0
    %11 = vsyncpa [#allocation6], 0
    %12 = vsyncpa [#allocation4], 0
    // Predicated region
    $region2: #{subnet_forward_prepared.1} parent=1 // pred_check
      _
    $region3: #{subnet_forward_prepared.1} parent=1 // pred_check_branch
      %14 = sbr.rel (0) target = $region5
    $region4: #{subnet_forward_prepared.1} parent=1 // pred_region
      _
    $region5: #{subnet_forward_prepared.1} parent=1 // pred_fallthru
      _
    // Predicated region
    $region6: #{subnet_forward_prepared.1} parent=1 // pred_check
      _
    $region7: #{subnet_forward_prepared.1} parent=1 // pred_check_branch
      %16 = sbr.rel (0) target = $region9
    $region8: #{subnet_forward_prepared.1} parent=1 // pred_region
      %s18 = ssub.s32 1024, 1024
      %19 = vsyncadd [#allocation3], %s18
      %s20 = sshll.u32 [#allocation2], 4
      %s21 = int_to_ptr.vmem [resolvable:$true] %s20
      %26 = dma.hbm_to_vmem [thread:$0]  %s1, 1024, %s21, [#allocation3], 64, 64, 4
    $region9: #{subnet_forward_prepared.1} parent=1 // pred_fallthru
      _
    // Predicated region
    $region10: #{subnet_forward_prepared.1} parent=1 // pred_check
      _
    $region11: #{subnet_forward_prepared.1} parent=1 // pred_check_branch
      %28 = sbr.rel (0) target = $region13
    $region12: #{subnet_forward_prepared.1} parent=1 // pred_region
      %s30 = ssub.s32 1024, 1024
      %31 = vsyncadd [#allocation6], %s30
      %s32 = sshll.u32 [#allocation5], 4
      %s33 = int_to_ptr.vmem [resolvable:$true] %s32
      %38 = dma.hbm_to_vmem [thread:$0]  %s2, 1024, %s33, [#allocation6], 64, 64, 4
    $region13: #{subnet_forward_prepared.1} parent=1 // pred_fallthru
      _
    // Predicated region
    $region14: #{subnet_forward_prepared.1} parent=1 // pred_check
      _
    $region15: #{subnet_forward_prepared.1} parent=1 // pred_check_branch
      %40 = sbr.rel (0) target = $region17
    $region16: #{subnet_forward_prepared.1} parent=1 // pred_region
      %s42 = ssub.s32 1024, 1024
      %43 = vsyncadd [#allocation6], %s42
      %s44 = sshll.u32 [#allocation7], 4
      %s45 = int_to_ptr.vmem [resolvable:$true] %s44
      %50 = dma.hbm_to_vmem [thread:$0]  %s3, 1024, %s45, [#allocation6], 64, 64, 4
    $region17: #{subnet_forward_prepared.1} parent=1 // pred_fallthru
      _
    // Predicated region
    $region18: #{subnet_forward_prepared.1} parent=1 // pred_check
      _
    $region19: #{subnet_forward_prepared.1} parent=1 // pred_check_branch
      %52 = sbr.rel (0) target = $region21
    $region20: #{subnet_forward_prepared.1} parent=1 // pred_region
      _
    $region21: #{subnet_forward_prepared.1} parent=1 // pred_fallthru
      _
    // Predicated region
    $region22: #{subnet_forward_prepared.1} parent=1 // pred_check
      _
    $region23: #{subnet_forward_prepared.1} parent=1 // pred_check_branch
      %54 = sbr.rel (0) target = $region25
    $region24: #{subnet_forward_prepared.1} parent=1 // pred_region
      %55 = dma.done [#allocation3], 1024
    $region25: #{subnet_forward_prepared.1} parent=1 // pred_fallthru
      _
    // Predicated region
    $region26: #{subnet_forward_prepared.1} parent=1 // pred_check
      _
    $region27: #{subnet_forward_prepared.1} parent=1 // pred_check_branch
      %57 = sbr.rel (0) target = $region29
    $region28: #{subnet_forward_prepared.1} parent=1 // pred_region
      %58 = dma.done [#allocation6], 1024
    $region29: #{subnet_forward_prepared.1} parent=1 // pred_fallthru
      _
    // Predicated region
    $region30: #{subnet_forward_prepared.1} parent=1 // pred_check
      _
    $region31: #{subnet_forward_prepared.1} parent=1 // pred_check_branch
      %60 = sbr.rel (0) target = $region33
    $region32: #{subnet_forward_prepared.1} parent=1 // pred_region
      %61 = dma.done [#allocation6], 1024
    $region33: #{subnet_forward_prepared.1} parent=1 // pred_fallthru
      _
    %v63 = vld [vmem:[%s0] sm:$0xff]
    %v64 = vpack.c.bf16 %v63, %v63
    %v65 = vld [vmem:[%s4] sm:$0xff]
    %v66 = vld [vmem:[#allocation2] sm:$0xf]
    %v67 = vld [vmem:[#allocation2 + $0x4] sm:$0xf]
    %v68 = vld [vmem:[#allocation2 + $0x8] sm:$0xf]
    %v69 = vld [vmem:[#allocation2 + $0xc] sm:$0xf]
    %v70 = vld [vmem:[#allocation2 + $0x10] sm:$0xf]
    %v71 = vld [vmem:[#allocation2 + $0x14] sm:$0xf]
    %v72 = vld [vmem:[#allocation2 + $0x18] sm:$0xf]
    %v73 = vld [vmem:[#allocation2 + $0x1c] sm:$0xf]
    %v74 = vld [vmem:[#allocation2 + $0x20] sm:$0xf]
    %v75 = vld [vmem:[#allocation2 + $0x24] sm:$0xf]
    %v76 = vld [vmem:[#allocation2 + $0x28] sm:$0xf]
    %v77 = vld [vmem:[#allocation2 + $0x2c] sm:$0xf]
    %v78 = vld [vmem:[#allocation2 + $0x30] sm:$0xf]
    %v79 = vld [vmem:[#allocation2 + $0x34] sm:$0xf]
    %v80 = vld [vmem:[#allocation2 + $0x38] sm:$0xf]
    %v81 = vld [vmem:[#allocation2 + $0x3c] sm:$0xf]
    %v82 = vlaneseq
    %v83 = vshrl.u32 %v82, 7
    %v84 = vsub.s32 0, %v83
    %v85 = vrot.slane %v65, %v84
    %v102 = vunpack.c.l.b16 %v66
    %v103 = vunpack.c.l.b16 %v67
    %v104 = vunpack.c.l.b16 %v68
    %v105 = vunpack.c.l.b16 %v69
    %v106 = vunpack.c.l.b16 %v70
    %v107 = vunpack.c.l.b16 %v71
    %v108 = vunpack.c.l.b16 %v72
    %v109 = vunpack.c.l.b16 %v73
    %v110 = vunpack.c.l.b16 %v74
    %v111 = vunpack.c.l.b16 %v75
    %v112 = vunpack.c.l.b16 %v76
    %v113 = vunpack.c.l.b16 %v77
    %v114 = vunpack.c.l.b16 %v78
    %v115 = vunpack.c.l.b16 %v79
    %v116 = vunpack.c.l.b16 %v80
    %v117 = vunpack.c.l.b16 %v81
    %v118 = vpack.c.b16 %v103, %v102
    %v119 = vpack.c.b16 %v105, %v104
    %v120 = vpack.c.b16 %v107, %v106
    %v121 = vpack.c.b16 %v109, %v108
    %v122 = vpack.c.b16 %v111, %v110
    %v123 = vpack.c.b16 %v113, %v112
    %v124 = vpack.c.b16 %v115, %v114
    %v125 = vpack.c.b16 %v117, %v116
    %134 = vmatprep.subr.bf16.mxu0 0
    %135 = vmatpush1.bf16.msra.mxu0 %v118
    %136 = vmatprep.subr.bf16.mxu0 0
    %137 = vmatpush1.bf16.msra.mxu0 %v119
    %138 = vmatprep.subr.bf16.mxu0 0
    %139 = vmatpush1.bf16.msra.mxu0 %v120
    %140 = vmatprep.subr.bf16.mxu0 0
    %141 = vmatpush1.bf16.msra.mxu0 %v121
    %142 = vmatprep.subr.bf16.mxu0 0
    %143 = vmatpush1.bf16.msra.mxu0 %v122
    %144 = vmatprep.subr.bf16.mxu0 0
    %145 = vmatpush1.bf16.msra.mxu0 %v123
    %146 = vmatprep.subr.bf16.mxu0 0
    %147 = vmatpush1.bf16.msra.mxu0 %v124
    %148 = vmatprep.subr.bf16.mxu0 0
    %149 = vmatpush1.bf16.msra.mxu0 %v125
    %150 = vmatprep.subr.bf16.mxu0 0
    %151 = vmatpush1.bf16.msra.mxu0 0
    %152 = vmatprep.subr.bf16.mxu0 0
    %153 = vmatpush1.bf16.msra.mxu0 0
    %154 = vmatprep.subr.bf16.mxu0 0
    %155 = vmatpush1.bf16.msra.mxu0 0
    %156 = vmatprep.subr.bf16.mxu0 0
    %157 = vmatpush1.bf16.msra.mxu0 0
    %158 = vmatprep.subr.bf16.mxu0 0
    %159 = vmatpush1.bf16.msra.mxu0 0
    %160 = vmatprep.subr.bf16.mxu0 0
    %161 = vmatpush1.bf16.msra.mxu0 0
    %162 = vmatprep.subr.bf16.mxu0 0
    %163 = vmatpush1.bf16.msra.mxu0 0
    %164 = vmatprep.subr.bf16.mxu0 0
    %165 = vmatpush1.bf16.msra.mxu0 0
    %166 = vmatprep.mubr.bf16.mxu0 0
    %167 = vmatmul.mubr.bf16.gmra.mrb[0].mxu0 %v64
    %v168 = vpop.f32.mrb[0].mxu0
    %v169 = vadd.f32 %v85, %v168
    %v170 = vpop.f32.mrb[0].mxu0
    %v171 = vpop.f32.mrb[0].mxu0
    %v172 = vpop.f32.mrb[0].mxu0
    %173 = vdwg.mxu0
    %v174 = vmax.f32 %v169, 0.0
    %v175 = vpack.c.bf16 %v174, %v174
    %v176 = vld [vmem:[#allocation5] sm:$0xf]
    %v177 = vld [vmem:[#allocation5 + $0x4] sm:$0xf]
    %v178 = vld [vmem:[#allocation5 + $0x8] sm:$0xf]
    %v179 = vld [vmem:[#allocation5 + $0xc] sm:$0xf]
    %v180 = vld [vmem:[#allocation5 + $0x10] sm:$0xf]
    %v181 = vld [vmem:[#allocation5 + $0x14] sm:$0xf]
    %v182 = vld [vmem:[#allocation5 + $0x18] sm:$0xf]
    %v183 = vld [vmem:[#allocation5 + $0x1c] sm:$0xf]
    %v184 = vld [vmem:[#allocation5 + $0x20] sm:$0xf]
    %v185 = vld [vmem:[#allocation5 + $0x24] sm:$0xf]
    %v186 = vld [vmem:[#allocation5 + $0x28] sm:$0xf]
    %v187 = vld [vmem:[#allocation5 + $0x2c] sm:$0xf]
    %v188 = vld [vmem:[#allocation5 + $0x30] sm:$0xf]
    %v189 = vld [vmem:[#allocation5 + $0x34] sm:$0xf]
    %v190 = vld [vmem:[#allocation5 + $0x38] sm:$0xf]
    %v191 = vld [vmem:[#allocation5 + $0x3c] sm:$0xf]
    %v192 = vlaneseq
    %v193 = vshrl.u32 %v192, 7
    %v194 = vsub.s32 1, %v193
    %v195 = vrot.slane %v65, %v194
    %v212 = vunpack.c.l.b16 %v176
    %v213 = vunpack.c.l.b16 %v177
    %v214 = vunpack.c.l.b16 %v178
    %v215 = vunpack.c.l.b16 %v179
    %v216 = vunpack.c.l.b16 %v180
    %v217 = vunpack.c.l.b16 %v181
    %v218 = vunpack.c.l.b16 %v182
    %v219 = vunpack.c.l.b16 %v183
    %v220 = vunpack.c.l.b16 %v184
    %v221 = vunpack.c.l.b16 %v185
    %v222 = vunpack.c.l.b16 %v186
    %v223 = vunpack.c.l.b16 %v187
    %v224 = vunpack.c.l.b16 %v188
    %v225 = vunpack.c.l.b16 %v189
    %v226 = vunpack.c.l.b16 %v190
    %v227 = vunpack.c.l.b16 %v191
    %v228 = vpack.c.b16 %v213, %v212
    %v229 = vpack.c.b16 %v215, %v214
    %v230 = vpack.c.b16 %v217, %v216
    %v231 = vpack.c.b16 %v219, %v218
    %v232 = vpack.c.b16 %v221, %v220
    %v233 = vpack.c.b16 %v223, %v222
    %v234 = vpack.c.b16 %v225, %v224
    %v235 = vpack.c.b16 %v227, %v226
    %244 = vmatprep.subr.bf16.mxu0 0
    %245 = vmatpush1.bf16.msra.mxu0 %v228
    %246 = vmatprep.subr.bf16.mxu0 0
    %247 = vmatpush1.bf16.msra.mxu0 %v229
    %248 = vmatprep.subr.bf16.mxu0 0
    %249 = vmatpush1.bf16.msra.mxu0 %v230
    %250 = vmatprep.subr.bf16.mxu0 0
    %251 = vmatpush1.bf16.msra.mxu0 %v231
    %252 = vmatprep.subr.bf16.mxu0 0
    %253 = vmatpush1.bf16.msra.mxu0 %v232
    %254 = vmatprep.subr.bf16.mxu0 0
    %255 = vmatpush1.bf16.msra.mxu0 %v233
    %256 = vmatprep.subr.bf16.mxu0 0
    %257 = vmatpush1.bf16.msra.mxu0 %v234
    %258 = vmatprep.subr.bf16.mxu0 0
    %259 = vmatpush1.bf16.msra.mxu0 %v235
    %260 = vmatprep.subr.bf16.mxu0 0
    %261 = vmatpush1.bf16.msra.mxu0 0
    %262 = vmatprep.subr.bf16.mxu0 0
    %263 = vmatpush1.bf16.msra.mxu0 0
    %264 = vmatprep.subr.bf16.mxu0 0
    %265 = vmatpush1.bf16.msra.mxu0 0
    %266 = vmatprep.subr.bf16.mxu0 0
    %267 = vmatpush1.bf16.msra.mxu0 0
    %268 = vmatprep.subr.bf16.mxu0 0
    %269 = vmatpush1.bf16.msra.mxu0 0
    %270 = vmatprep.subr.bf16.mxu0 0
    %271 = vmatpush1.bf16.msra.mxu0 0
    %272 = vmatprep.subr.bf16.mxu0 0
    %273 = vmatpush1.bf16.msra.mxu0 0
    %274 = vmatprep.subr.bf16.mxu0 0
    %275 = vmatpush1.bf16.msra.mxu0 0
    %276 = vmatprep.mubr.bf16.mxu0 0
    %277 = vmatmul.mubr.bf16.gmra.mrb[0].mxu0 %v175
    %v278 = vpop.f32.mrb[0].mxu0
    %v279 = vadd.f32 %v195, %v278
    %v280 = vpop.f32.mrb[0].mxu0
    %v281 = vpop.f32.mrb[0].mxu0
    %v282 = vpop.f32.mrb[0].mxu0
    %283 = vdwg.mxu0
    %v284 = vmax.f32 %v279, 0.0
    %v285 = vpack.c.bf16 %v284, %v284
    %v286 = vld [vmem:[#allocation7] sm:$0xf]
    %v287 = vld [vmem:[#allocation7 + $0x4] sm:$0xf]
    %v288 = vld [vmem:[#allocation7 + $0x8] sm:$0xf]
    %v289 = vld [vmem:[#allocation7 + $0xc] sm:$0xf]
    %v290 = vld [vmem:[#allocation7 + $0x10] sm:$0xf]
    %v291 = vld [vmem:[#allocation7 + $0x14] sm:$0xf]
    %v292 = vld [vmem:[#allocation7 + $0x18] sm:$0xf]
    %v293 = vld [vmem:[#allocation7 + $0x1c] sm:$0xf]
    %v294 = vld [vmem:[#allocation7 + $0x20] sm:$0xf]
    %v295 = vld [vmem:[#allocation7 + $0x24] sm:$0xf]
    %v296 = vld [vmem:[#allocation7 + $0x28] sm:$0xf]
    %v297 = vld [vmem:[#allocation7 + $0x2c] sm:$0xf]
    %v298 = vld [vmem:[#allocation7 + $0x30] sm:$0xf]
    %v299 = vld [vmem:[#allocation7 + $0x34] sm:$0xf]
    %v300 = vld [vmem:[#allocation7 + $0x38] sm:$0xf]
    %v301 = vld [vmem:[#allocation7 + $0x3c] sm:$0xf]
    %v302 = vlaneseq
    %v303 = vshrl.u32 %v302, 7
    %v304 = vsub.s32 2, %v303
    %v305 = vrot.slane %v65, %v304
    %v322 = vunpack.c.l.b16 %v286
    %v323 = vunpack.c.l.b16 %v287
    %v324 = vunpack.c.l.b16 %v288
    %v325 = vunpack.c.l.b16 %v289
    %v326 = vunpack.c.l.b16 %v290
    %v327 = vunpack.c.l.b16 %v291
    %v328 = vunpack.c.l.b16 %v292
    %v329 = vunpack.c.l.b16 %v293
    %v330 = vunpack.c.l.b16 %v294
    %v331 = vunpack.c.l.b16 %v295
    %v332 = vunpack.c.l.b16 %v296
    %v333 = vunpack.c.l.b16 %v297
    %v334 = vunpack.c.l.b16 %v298
    %v335 = vunpack.c.l.b16 %v299
    %v336 = vunpack.c.l.b16 %v300
    %v337 = vunpack.c.l.b16 %v301
    %v338 = vpack.c.b16 %v323, %v322
    %v339 = vpack.c.b16 %v325, %v324
    %v340 = vpack.c.b16 %v327, %v326
    %v341 = vpack.c.b16 %v329, %v328
    %v342 = vpack.c.b16 %v331, %v330
    %v343 = vpack.c.b16 %v333, %v332
    %v344 = vpack.c.b16 %v335, %v334
    %v345 = vpack.c.b16 %v337, %v336
    %354 = vmatprep.subr.bf16.mxu0 0
    %355 = vmatpush1.bf16.msra.mxu0 %v338
    %356 = vmatprep.subr.bf16.mxu0 0
    %357 = vmatpush1.bf16.msra.mxu0 %v339
    %358 = vmatprep.subr.bf16.mxu0 0
    %359 = vmatpush1.bf16.msra.mxu0 %v340
    %360 = vmatprep.subr.bf16.mxu0 0
    %361 = vmatpush1.bf16.msra.mxu0 %v341
    %362 = vmatprep.subr.bf16.mxu0 0
    %363 = vmatpush1.bf16.msra.mxu0 %v342
    %364 = vmatprep.subr.bf16.mxu0 0
    %365 = vmatpush1.bf16.msra.mxu0 %v343
    %366 = vmatprep.subr.bf16.mxu0 0
    %367 = vmatpush1.bf16.msra.mxu0 %v344
    %368 = vmatprep.subr.bf16.mxu0 0
    %369 = vmatpush1.bf16.msra.mxu0 %v345
    %370 = vmatprep.subr.bf16.mxu0 0
    %371 = vmatpush1.bf16.msra.mxu0 0
    %372 = vmatprep.subr.bf16.mxu0 0
    %373 = vmatpush1.bf16.msra.mxu0 0
    %374 = vmatprep.subr.bf16.mxu0 0
    %375 = vmatpush1.bf16.msra.mxu0 0
    %376 = vmatprep.subr.bf16.mxu0 0
    %377 = vmatpush1.bf16.msra.mxu0 0
    %378 = vmatprep.subr.bf16.mxu0 0
    %379 = vmatpush1.bf16.msra.mxu0 0
    %380 = vmatprep.subr.bf16.mxu0 0
    %381 = vmatpush1.bf16.msra.mxu0 0
    %382 = vmatprep.subr.bf16.mxu0 0
    %383 = vmatpush1.bf16.msra.mxu0 0
    %384 = vmatprep.subr.bf16.mxu0 0
    %385 = vmatpush1.bf16.msra.mxu0 0
    %386 = vmatprep.mubr.bf16.mxu0 0
    %387 = vmatmul.mubr.bf16.gmra.mrb[0].mxu0 %v285
    %v388 = vpop.f32.mrb[0].mxu0
    %v389 = vadd.f32 %v305, %v388
    %v390 = vpop.f32.mrb[0].mxu0
    %v391 = vpop.f32.mrb[0].mxu0
    %v392 = vpop.f32.mrb[0].mxu0
    %393 = vdwg.mxu0
    %v394 = vmax.f32 %v389, 0.0
    %395 = vst [vmem:[#allocation8] sm:$0xff] %v394
    // Predicated region
    $region34: #{subnet_forward_prepared.1} parent=1 // pred_check
      _
    $region35: #{subnet_forward_prepared.1} parent=1 // pred_check_branch
      %397 = sbr.rel (0) target = $region37
    $region36: #{subnet_forward_prepared.1} parent=1 // pred_region
      %s399 = ssub.s32 128, 128
      %400 = vsyncadd [#allocation4], %s399
      %s402 = sshll.u32 [#allocation8], 4
      %s403 = int_to_ptr.vmem [resolvable:$true] %s402
      %405 = dma.vmem_to_hbm [thread:$0]  %s403, 128, %s5, [#allocation4]
    $region37: #{subnet_forward_prepared.1} parent=1 // pred_fallthru
      _
    // Predicated region
    $region38: #{subnet_forward_prepared.1} parent=1 // pred_check
      _
    $region39: #{subnet_forward_prepared.1} parent=1 // pred_check_branch
      %407 = sbr.rel (0) target = $region41
    $region40: #{subnet_forward_prepared.1} parent=1 // pred_region
      %408 = dma.done [#allocation4], 128
    $region41: #{subnet_forward_prepared.1} parent=1 // pred_fallthru
      _
    %409 = vsyncpa [#allocation3], 1
    %410 = vsyncpa [#allocation6], 1
    %411 = vsyncpa [#allocation4], 1

</llo_original>
